<compile_context>
chip_gen: v6e
topology: v6e:2x2x1
jax: 0.10.0
libtpu: 0.0.40
codegen_flags: <defaults>
</compile_context>

<pallas_src>
import functools

import jax
import jax.numpy as jnp
from jax.experimental import pallas as pl
from jax.experimental.pallas import tpu as pltpu


def _cdiv(a, b):
    return -(-a // b)


def _round_up(a, b):
    return _cdiv(a, b) * b


def schnet_mlp_kernel(*refs, n_layers):
    """Chain of Linear(+bias)+ReLU layers, fused.

    refs = (x_ref, w1, b1, ..., wL, bL, out_ref).
    Matmuls run on the MXU with bf16 operands / f32 accumulation; bias + ReLU
    in f32.  All layer activations are concatenated in registers and written
    with a single full-width bf16 store into the output slab.
    """
    x_ref = refs[0]
    o_ref = refs[-1]
    h = x_ref[...]                                    # bf16 (tm, din_p)
    acts = []
    for li in range(n_layers):
        w_ref = refs[1 + 2 * li]
        b_ref = refs[2 + 2 * li]
        acc = jnp.dot(h, w_ref[...], preferred_element_type=jnp.float32)
        h = jnp.maximum(acc + b_ref[...], 0.0).astype(jnp.bfloat16)
        acts.append(h)                                # stored value == next LHS
    o_ref[...] = jnp.concatenate(acts, axis=-1)       # one lane-dense store


@functools.partial(jax.jit, static_argnames=("tm",))
def schnet_adapter_forward_slab(pos, z, cz, params, tm=4096):
    """Runs the fused MLP; returns the packed activation slab (N, 4H + H//2)
    in bf16.  Column layout: [act1 | act2 | act3 | act4 | act5]."""
    atom_emb = params["atom_emb"]        # (100, H)
    cluster_emb = params["cluster_emb"]  # (num_clusters, H)
    weights = params["weights"]          # [(Din,H),(H,H),(H,H),(H,H),(H,H//2)]
    biases = params["biases"]            # [(1,H)]*4 + [(1,H//2)]
    n_layers = len(weights)

    N = pos.shape[0]
    din = 3 + atom_emb.shape[1] + cluster_emb.shape[1]

    # Glue (plain JAX): embedding gathers + concat, built directly in bf16 so
    # no f32 (N, din) intermediate hits HBM before the kernel.
    x_bf = jnp.concatenate(
        [pos.astype(jnp.bfloat16),
         jnp.take(atom_emb.astype(jnp.bfloat16), z, axis=0),
         jnp.take(cluster_emb.astype(jnp.bfloat16), cz, axis=0)],
        axis=-1)                                      # (N, din) bf16

    # --- layout prep (zero padding => no numerical effect) -------------------
    din_p = _round_up(din, 16)            # bf16 sublane packing; NOT padded to 128
    # Row tile: big tiles amortize the ~0.35us/step grid overhead, but keep the
    # grid at >= ~8 steps so both v7x TensorCores get work ("parallel" axis)
    # and each core has pipeline depth to overlap DMA with compute.
    MIN_GRID_STEPS = 8
    tm_target = _round_up(max(int(tm), 16), 16)
    tm_fit = _round_up(max(_cdiv(N, MIN_GRID_STEPS), 1), 16)
    tm = min(tm_target, tm_fit)
    n_p = _round_up(N, tm)

    x_bf = jnp.pad(x_bf, ((0, n_p - N), (0, din_p - din)))

    w_bf = [jnp.pad(weights[0], ((0, din_p - din), (0, 0))).astype(jnp.bfloat16)]
    w_bf += [w.astype(jnp.bfloat16) for w in weights[1:]]
    b_f32 = [b.astype(jnp.float32) for b in biases]

    widths = [int(w.shape[1]) for w in weights]
    w_tot = sum(widths)                               # 4H + H//2 (=144 for H=32)

    # --- specs ---------------------------------------------------------------
    in_specs = [pl.BlockSpec((tm, din_p), lambda i: (i, 0))]
    flat_wb = []
    for w, b in zip(w_bf, b_f32):
        # Grid-invariant operands (constant index_map): Pallas keeps the block
        # index unchanged across steps so these tiny (~20 KB total) blocks are
        # not re-DMA'd every iteration.
        in_specs.append(pl.BlockSpec(w.shape, lambda i: (0, 0)))
        in_specs.append(pl.BlockSpec(b.shape, lambda i: (0, 0)))
        flat_wb.extend([w, b])

    out_spec = pl.BlockSpec((tm, w_tot), lambda i: (i, 0))
    out_shape = jax.ShapeDtypeStruct((n_p, w_tot), jnp.bfloat16)   # bf16 slab

    cost = pl.CostEstimate(
        flops=2 * int(n_p) * sum(int(w.shape[0]) * int(w.shape[1]) for w in w_bf),
        transcendentals=0,
        bytes_accessed=int(n_p) * int(din_p) * 2
        + sum(int(w.size) * 2 for w in w_bf)
        + sum(int(b.size) * 4 for b in b_f32)
        + int(n_p) * int(w_tot) * 2,
    )

    # VMEM estimate (double-buffered input + output tiles + resident weights).
    vmem_est = 2 * tm * (din_p * 2 + w_tot * 2) \
        + sum(int(w.size) * 2 for w in w_bf) + sum(int(b.size) * 4 for b in b_f32)
    cp_kwargs = dict(dimension_semantics=("parallel",))
    if vmem_est > 24 * 1024 * 1024:
        # Only needed for very large requested tiles; stay inside v7x's 64 MiB.
        cp_kwargs["vmem_limit_bytes"] = min(int(vmem_est * 3 // 2), 48 * 1024 * 1024)

    kernel = functools.partial(schnet_mlp_kernel, n_layers=n_layers)

    slab = pl.pallas_call(
        kernel,
        out_shape=out_shape,
        grid_spec=pltpu.PrefetchScalarGridSpec(
            num_scalar_prefetch=0,
            grid=(n_p // tm,),
            in_specs=in_specs,
            out_specs=out_spec,
        ),
        compiler_params=pltpu.CompilerParams(**cp_kwargs),
        cost_estimate=cost,
    )(x_bf, *flat_wb)

    # Padded rows [N, n_p) contain ReLU(bias) garbage; trim them here.
    return slab[:N]


def slab_offsets(params):
    """Static (offset, width) pairs for each layer's columns in the slab."""
    widths = [int(w.shape[1]) for w in params["weights"]]
    offs, acc = [], 0
    for wd in widths:
        offs.append(acc)
        acc += wd
    return list(zip(offs, widths))


def schnet_adapter_forward(pos, z, cz, params, tm=4096):
    """Compatibility API: returns the module's list of 5 activations (bf16).
    Production consumers should use `schnet_adapter_forward_slab` directly and
    index the packed slab to avoid extra HBM re-slicing traffic."""
    slab = schnet_adapter_forward_slab(pos, z, cz, params, tm=tm)
    return [slab[:, off:off + wd] for off, wd in slab_offsets(params)]


def init_params(key, hidden_channels=32, num_interactions=3, num_clusters=100):
    num_layers = num_interactions + 2
    input_dim = 3 + hidden_channels * 2
    keys = jax.random.split(key, 2 + 2 * num_layers)

    atom_emb = jax.random.normal(keys[0], (100, hidden_channels), jnp.float32)
    cluster_emb = jax.random.normal(keys[1], (num_clusters, hidden_channels),
                                    jnp.float32)

    weights, biases = [], []
    in_dim = input_dim
    for li in range(num_layers):
        out_dim = hidden_channels if li < num_layers - 1 else hidden_channels // 2
        scale = 1.0 / jnp.sqrt(jnp.float32(in_dim))
        w = scale * jax.random.normal(keys[2 + 2 * li], (in_dim, out_dim), jnp.float32)
        b = scale * jax.random.normal(keys[3 + 2 * li], (1, out_dim), jnp.float32)
        weights.append(w)
        biases.append(b)
        in_dim = out_dim

    return {"atom_emb": atom_emb, "cluster_emb": cluster_emb,
            "weights": weights, "biases": biases}


def reference_forward(pos, z, cz, params, matmul_dtype=jnp.float32):
    """Plain-JAX reference.  matmul_dtype=bf16 mimics the kernel's MXU numerics
    (bf16 operands, f32 accumulation, f32 bias + ReLU).  Outputs are f32."""
    x = jnp.concatenate(
        [pos, params["atom_emb"][z], params["cluster_emb"][cz]], axis=-1)
    h = x.astype(matmul_dtype)
    outs = []
    for w, b in zip(params["weights"], params["biases"]):
        a = jnp.dot(h, w.astype(matmul_dtype),
                    preferred_element_type=jnp.float32) + b
        a = jnp.maximum(a, 0.0)
        outs.append(a)
        h = a.astype(matmul_dtype)
    return outs


if __name__ == "__main__":
    hidden_channels = 32
    num_interactions = 3
    num_clusters = 100
    N = 64  # number of atoms

    key = jax.random.PRNGKey(0)
    k_pos, k_z, k_cz, k_params = jax.random.split(key, 4)

    pos = jax.random.normal(k_pos, (N, 3), jnp.float32)
    z = jax.random.randint(k_z, (N,), 0, 100, jnp.int32)
    cz = jax.random.randint(k_cz, (N,), 0, num_clusters, jnp.int32)

    params = init_params(k_params, hidden_channels, num_interactions, num_clusters)

    # Default tm=4096; the grid-step floor automatically shrinks the tile for
    # this tiny demo so the 1-D "parallel" grid still has several steps
    # (keeps both v7x TensorCores busy).  For production N the full 4096-row
    # tile is used.
    outs = schnet_adapter_forward(pos, z, cz, params)
    outs = [jax.block_until_ready(o) for o in outs]

    refs_bf16 = reference_forward(pos, z, cz, params, matmul_dtype=jnp.bfloat16)
    refs_f32 = reference_forward(pos, z, cz, params, matmul_dtype=jnp.float32)
    for o, rb, rf in zip(outs, refs_bf16, refs_f32):
        assert o.shape == rf.shape
        o32 = o.astype(jnp.float32)
        # Tight check vs a reference with identical numerics (bf16 MXU operands,
        # f32 accumulation, bf16-quantized stored activations).
        rb_q = rb.astype(jnp.bfloat16).astype(jnp.float32)
        assert jnp.max(jnp.abs(o32 - rb_q)) < 2e-2
        # Loose sanity check vs full-f32 math.
        assert jnp.max(jnp.abs(o32 - rf)) < 2e-1
    print("KERNEL_OK")
</pallas_src>

<mosaic_0001>
module attributes {stable_mosaic.version = 11 : i64} {
  func.func @schnet_mlp_kernel(%arg0: i32, %arg1: memref<16x80xbf16, #tpu.memory_space<vmem>>, %arg2: memref<80x32xbf16, #tpu.memory_space<vmem>>, %arg3: memref<1x32xf32, #tpu.memory_space<vmem>>, %arg4: memref<32x32xbf16, #tpu.memory_space<vmem>>, %arg5: memref<1x32xf32, #tpu.memory_space<vmem>>, %arg6: memref<32x32xbf16, #tpu.memory_space<vmem>>, %arg7: memref<1x32xf32, #tpu.memory_space<vmem>>, %arg8: memref<32x32xbf16, #tpu.memory_space<vmem>>, %arg9: memref<1x32xf32, #tpu.memory_space<vmem>>, %arg10: memref<32x16xbf16, #tpu.memory_space<vmem>>, %arg11: memref<1x16xf32, #tpu.memory_space<vmem>>, %arg12: memref<16x144xbf16, #tpu.memory_space<vmem>>) attributes {dimension_semantics = [#tpu.dimension_semantics<parallel>], iteration_bounds = array<i64: 4>, scalar_prefetch = 0 : i64, scratch_operands = 0 : i64, tpu.core_type = #tpu.core_type<tc>, window_params = [{transform_indices = @transform_0, window_bounds = array<i64: 16, 80>}, {pipeline_mode = #tpu.pipeline_mode<synchronous>, transform_indices = @transform_1, window_bounds = array<i64: 80, 32>}, {pipeline_mode = #tpu.pipeline_mode<synchronous>, transform_indices = @transform_2, window_bounds = array<i64: 1, 32>}, {pipeline_mode = #tpu.pipeline_mode<synchronous>, transform_indices = @transform_3, window_bounds = array<i64: 32, 32>}, {pipeline_mode = #tpu.pipeline_mode<synchronous>, transform_indices = @transform_4, window_bounds = array<i64: 1, 32>}, {pipeline_mode = #tpu.pipeline_mode<synchronous>, transform_indices = @transform_5, window_bounds = array<i64: 32, 32>}, {pipeline_mode = #tpu.pipeline_mode<synchronous>, transform_indices = @transform_6, window_bounds = array<i64: 1, 32>}, {pipeline_mode = #tpu.pipeline_mode<synchronous>, transform_indices = @transform_7, window_bounds = array<i64: 32, 32>}, {pipeline_mode = #tpu.pipeline_mode<synchronous>, transform_indices = @transform_8, window_bounds = array<i64: 1, 32>}, {pipeline_mode = #tpu.pipeline_mode<synchronous>, transform_indices = @transform_9, window_bounds = array<i64: 32, 16>}, {pipeline_mode = #tpu.pipeline_mode<synchronous>, transform_indices = @transform_10, window_bounds = array<i64: 1, 16>}, {transform_indices = @transform_11, window_bounds = array<i64: 16, 144>}]} {
    %c0 = arith.constant 0 : index
    %c0_0 = arith.constant 0 : index
    %0 = vector.load %arg1[%c0, %c0_0] : memref<16x80xbf16, #tpu.memory_space<vmem>>, vector<16x80xbf16>
    %c0_1 = arith.constant 0 : index
    %c0_2 = arith.constant 0 : index
    %1 = vector.load %arg2[%c0_1, %c0_2] : memref<80x32xbf16, #tpu.memory_space<vmem>>, vector<80x32xbf16>
    %cst = arith.constant dense<0.000000e+00> : vector<16x32xf32>
    %2 = tpu.matmul %0, %1, %cst {dimension_numbers = #tpu.dot_dimension_numbers<[1], [0], [0], [1], [0, 0, 1, 1], [], []>} : vector<16x80xbf16>, vector<80x32xbf16>, vector<16x32xf32> -> vector<16x32xf32>
    %c0_3 = arith.constant 0 : index
    %c0_4 = arith.constant 0 : index
    %3 = vector.load %arg3[%c0_3, %c0_4] : memref<1x32xf32, #tpu.memory_space<vmem>>, vector<1x32xf32>
    %4 = vector.broadcast %3 : vector<1x32xf32> to vector<16x32xf32>
    %5 = arith.addf %2, %4 : vector<16x32xf32>
    %cst_5 = arith.constant 0.000000e+00 : f32
    %6 = vector.broadcast %cst_5 : f32 to vector<16x32xf32>
    %7 = arith.maximumf %5, %6 : vector<16x32xf32>
    %8 = arith.truncf %7 : vector<16x32xf32> to vector<16x32xbf16>
    %c0_6 = arith.constant 0 : index
    %c0_7 = arith.constant 0 : index
    %9 = vector.load %arg4[%c0_6, %c0_7] : memref<32x32xbf16, #tpu.memory_space<vmem>>, vector<32x32xbf16>
    %cst_8 = arith.constant dense<0.000000e+00> : vector<16x32xf32>
    %10 = tpu.matmul %8, %9, %cst_8 {dimension_numbers = #tpu.dot_dimension_numbers<[1], [0], [0], [1], [0, 0, 1, 1], [], []>} : vector<16x32xbf16>, vector<32x32xbf16>, vector<16x32xf32> -> vector<16x32xf32>
    %c0_9 = arith.constant 0 : index
    %c0_10 = arith.constant 0 : index
    %11 = vector.load %arg5[%c0_9, %c0_10] : memref<1x32xf32, #tpu.memory_space<vmem>>, vector<1x32xf32>
    %12 = vector.broadcast %11 : vector<1x32xf32> to vector<16x32xf32>
    %13 = arith.addf %10, %12 : vector<16x32xf32>
    %cst_11 = arith.constant 0.000000e+00 : f32
    %14 = vector.broadcast %cst_11 : f32 to vector<16x32xf32>
    %15 = arith.maximumf %13, %14 : vector<16x32xf32>
    %16 = arith.truncf %15 : vector<16x32xf32> to vector<16x32xbf16>
    %c0_12 = arith.constant 0 : index
    %c0_13 = arith.constant 0 : index
    %17 = vector.load %arg6[%c0_12, %c0_13] : memref<32x32xbf16, #tpu.memory_space<vmem>>, vector<32x32xbf16>
    %cst_14 = arith.constant dense<0.000000e+00> : vector<16x32xf32>
    %18 = tpu.matmul %16, %17, %cst_14 {dimension_numbers = #tpu.dot_dimension_numbers<[1], [0], [0], [1], [0, 0, 1, 1], [], []>} : vector<16x32xbf16>, vector<32x32xbf16>, vector<16x32xf32> -> vector<16x32xf32>
    %c0_15 = arith.constant 0 : index
    %c0_16 = arith.constant 0 : index
    %19 = vector.load %arg7[%c0_15, %c0_16] : memref<1x32xf32, #tpu.memory_space<vmem>>, vector<1x32xf32>
    %20 = vector.broadcast %19 : vector<1x32xf32> to vector<16x32xf32>
    %21 = arith.addf %18, %20 : vector<16x32xf32>
    %cst_17 = arith.constant 0.000000e+00 : f32
    %22 = vector.broadcast %cst_17 : f32 to vector<16x32xf32>
    %23 = arith.maximumf %21, %22 : vector<16x32xf32>
    %24 = arith.truncf %23 : vector<16x32xf32> to vector<16x32xbf16>
    %c0_18 = arith.constant 0 : index
    %c0_19 = arith.constant 0 : index
    %25 = vector.load %arg8[%c0_18, %c0_19] : memref<32x32xbf16, #tpu.memory_space<vmem>>, vector<32x32xbf16>
    %cst_20 = arith.constant dense<0.000000e+00> : vector<16x32xf32>
    %26 = tpu.matmul %24, %25, %cst_20 {dimension_numbers = #tpu.dot_dimension_numbers<[1], [0], [0], [1], [0, 0, 1, 1], [], []>} : vector<16x32xbf16>, vector<32x32xbf16>, vector<16x32xf32> -> vector<16x32xf32>
    %c0_21 = arith.constant 0 : index
    %c0_22 = arith.constant 0 : index
    %27 = vector.load %arg9[%c0_21, %c0_22] : memref<1x32xf32, #tpu.memory_space<vmem>>, vector<1x32xf32>
    %28 = vector.broadcast %27 : vector<1x32xf32> to vector<16x32xf32>
    %29 = arith.addf %26, %28 : vector<16x32xf32>
    %cst_23 = arith.constant 0.000000e+00 : f32
    %30 = vector.broadcast %cst_23 : f32 to vector<16x32xf32>
    %31 = arith.maximumf %29, %30 : vector<16x32xf32>
    %32 = arith.truncf %31 : vector<16x32xf32> to vector<16x32xbf16>
    %c0_24 = arith.constant 0 : index
    %c0_25 = arith.constant 0 : index
    %33 = vector.load %arg10[%c0_24, %c0_25] : memref<32x16xbf16, #tpu.memory_space<vmem>>, vector<32x16xbf16>
    %cst_26 = arith.constant dense<0.000000e+00> : vector<16x16xf32>
    %34 = tpu.matmul %32, %33, %cst_26 {dimension_numbers = #tpu.dot_dimension_numbers<[1], [0], [0], [1], [0, 0, 1, 1], [], []>} : vector<16x32xbf16>, vector<32x16xbf16>, vector<16x16xf32> -> vector<16x16xf32>
    %c0_27 = arith.constant 0 : index
    %c0_28 = arith.constant 0 : index
    %35 = vector.load %arg11[%c0_27, %c0_28] : memref<1x16xf32, #tpu.memory_space<vmem>>, vector<1x16xf32>
    %36 = vector.broadcast %35 : vector<1x16xf32> to vector<16x16xf32>
    %37 = arith.addf %34, %36 : vector<16x16xf32>
    %cst_29 = arith.constant 0.000000e+00 : f32
    %38 = vector.broadcast %cst_29 : f32 to vector<16x16xf32>
    %39 = arith.maximumf %37, %38 : vector<16x16xf32>
    %40 = arith.truncf %39 : vector<16x16xf32> to vector<16x16xbf16>
    %41 = tpu.concatenate %8, %16, %24, %32, %40 in 1 : vector<16x32xbf16>, vector<16x32xbf16>, vector<16x32xbf16>, vector<16x32xbf16>, vector<16x16xbf16> -> vector<16x144xbf16>
    %c0_30 = arith.constant 0 : index
    %c0_31 = arith.constant 0 : index
    %42 = vector.load %arg12[%c0_30, %c0_31] : memref<16x144xbf16, #tpu.memory_space<vmem>>, vector<16x144xbf16>
    tpu.vector_store %arg12[%c0_30, %c0_31], %41 {strides = array<i32>} : memref<16x144xbf16, #tpu.memory_space<vmem>>, vector<16x144xbf16>,
    return
  }
  func.func @transform_0(%arg0: i32) -> (i32, i32) {
    %c0_i32 = arith.constant 0 : i32
    %c0_i32_0 = arith.constant 0 : i32
    return %arg0, %c0_i32 : i32, i32
  }
  func.func @transform_1(%arg0: i32) -> (i32, i32) {
    %c0_i32 = arith.constant 0 : i32
    %c0_i32_0 = arith.constant 0 : i32
    %c0_i32_1 = arith.constant 0 : i32
    return %c0_i32, %c0_i32_0 : i32, i32
  }
  func.func @transform_2(%arg0: i32) -> (i32, i32) {
    %c0_i32 = arith.constant 0 : i32
    %c0_i32_0 = arith.constant 0 : i32
    %c0_i32_1 = arith.constant 0 : i32
    return %c0_i32, %c0_i32_0 : i32, i32
  }
  func.func @transform_3(%arg0: i32) -> (i32, i32) {
    %c0_i32 = arith.constant 0 : i32
    %c0_i32_0 = arith.constant 0 : i32
    %c0_i32_1 = arith.constant 0 : i32
    return %c0_i32, %c0_i32_0 : i32, i32
  }
  func.func @transform_4(%arg0: i32) -> (i32, i32) {
    %c0_i32 = arith.constant 0 : i32
    %c0_i32_0 = arith.constant 0 : i32
    %c0_i32_1 = arith.constant 0 : i32
    return %c0_i32, %c0_i32_0 : i32, i32
  }
  func.func @transform_5(%arg0: i32) -> (i32, i32) {
    %c0_i32 = arith.constant 0 : i32
    %c0_i32_0 = arith.constant 0 : i32
    %c0_i32_1 = arith.constant 0 : i32
    return %c0_i32, %c0_i32_0 : i32, i32
  }
  func.func @transform_6(%arg0: i32) -> (i32, i32) {
    %c0_i32 = arith.constant 0 : i32
    %c0_i32_0 = arith.constant 0 : i32
    %c0_i32_1 = arith.constant 0 : i32
    return %c0_i32, %c0_i32_0 : i32, i32
  }
  func.func @transform_7(%arg0: i32) -> (i32, i32) {
    %c0_i32 = arith.constant 0 : i32
    %c0_i32_0 = arith.constant 0 : i32
    %c0_i32_1 = arith.constant 0 : i32
    return %c0_i32, %c0_i32_0 : i32, i32
  }
  func.func @transform_8(%arg0: i32) -> (i32, i32) {
    %c0_i32 = arith.constant 0 : i32
    %c0_i32_0 = arith.constant 0 : i32
    %c0_i32_1 = arith.constant 0 : i32
    return %c0_i32, %c0_i32_0 : i32, i32
  }
  func.func @transform_9(%arg0: i32) -> (i32, i32) {
    %c0_i32 = arith.constant 0 : i32
    %c0_i32_0 = arith.constant 0 : i32
    %c0_i32_1 = arith.constant 0 : i32
    return %c0_i32, %c0_i32_0 : i32, i32
  }
  func.func @transform_10(%arg0: i32) -> (i32, i32) {
    %c0_i32 = arith.constant 0 : i32
    %c0_i32_0 = arith.constant 0 : i32
    %c0_i32_1 = arith.constant 0 : i32
    return %c0_i32, %c0_i32_0 : i32, i32
  }
  func.func @transform_11(%arg0: i32) -> (i32, i32) {
    %c0_i32 = arith.constant 0 : i32
    %c0_i32_0 = arith.constant 0 : i32
    return %arg0, %c0_i32 : i32, i32
  }
}

</mosaic_0001>

<llo_original>
// kernel: schnet_adapter_forward_slab.1
$region0: #{schnet_adapter_forward_slab.1}
  #allocation0 [shape = 'u32[]', space=smem, size = 0x4, offset = 0x4, fixed_abs, tag = 'smem constant byte address 0x4 - core index']
  #allocation1 [shape = 'u32[144,128]{1,0:T(1,128)}', space=vmem, size = 0x12000, scoped, tag = 'internal scratch']
  %s0 = inlined_call_operand.vmem [shape: bf16[64,80], index: 0, kind: input, shape index: {}]
  %s1 = inlined_call_operand.vmem [shape: bf16[80,32], index: 1, kind: input, shape index: {}]
  %s2 = inlined_call_operand.vmem [shape: f32[1,32], index: 2, kind: input, shape index: {}]
  %s3 = inlined_call_operand.vmem [shape: bf16[32,32], index: 3, kind: input, shape index: {}]
  %s4 = inlined_call_operand.vmem [shape: f32[1,32], index: 4, kind: input, shape index: {}]
  %s5 = inlined_call_operand.vmem [shape: bf16[32,32], index: 5, kind: input, shape index: {}]
  %s6 = inlined_call_operand.vmem [shape: f32[1,32], index: 6, kind: input, shape index: {}]
  %s7 = inlined_call_operand.vmem [shape: bf16[32,32], index: 7, kind: input, shape index: {}]
  %s8 = inlined_call_operand.vmem [shape: f32[1,32], index: 8, kind: input, shape index: {}]
  %s9 = inlined_call_operand.vmem [shape: bf16[32,16], index: 9, kind: input, shape index: {}]
  %s10 = inlined_call_operand.vmem [shape: f32[1,16], index: 10, kind: input, shape index: {}]
  %s11 = inlined_call_operand.hbm [shape: bf16[64,144], index: 11, kind: output, shape index: {}]
  %s12 = sld [smem:[#allocation0]]
  $region77: #{schnet_adapter_forward_slab.1} parent=0
    _
  %s14 = ssub.s32 1, %s12
  %s15 = scalar_select 0, %s14, %s12
  $region1: #{schnet_adapter_forward_slab.1} parent=0
    #allocation2 [shape = 'u8[16384]{0}', space=vmem, size = 0x4000, scoped, tag = 'output window, operand 0']
    #allocation3 [shape = 's32[2]{0}', space=sflag, size = 0x8, scoped, tag = 'scoped memory for schnet_adapter_forward_slab.1']
    %16 = vsyncpa [#allocation3], 0
    %s17 = scalar_lea.sflag [#allocation3], 1
    %18 = vsyncpa %s17, 0
    loop: start=0, step=1, limit=6
    $region2: #{schnet_adapter_forward_slab.1} parent=1 // loop_pre_header
      _
    $region3: #{schnet_adapter_forward_slab.1} parent=1 // loop_header
      %s20 = sphi 0, %s24
      %p21 = scmp.ge.s32.totalorder %s20, 6
      %s30 = sphi 0, %s32
      %s33 = sphi 0, %s30
      %s34 = sphi 0, %s33
      %s50 = sphi 0, %s34
      %s54 = sphi 0, %s54
      %s56 = sphi 0, %s54
      %s57 = sphi 0, %s56
      %s71 = sphi 0, %s57
      %s75 = sphi 0, %s75
      %s77 = sphi 0, %s75
      %s78 = sphi 0, %s77
      %s92 = sphi 0, %s78
      %s96 = sphi 0, %s96
      %s98 = sphi 0, %s96
      %s99 = sphi 0, %s98
      %s113 = sphi 0, %s99
      %s117 = sphi 0, %s117
      %s119 = sphi 0, %s117
      %s120 = sphi 0, %s119
      %s134 = sphi 0, %s120
      %s138 = sphi 0, %s138
      %s140 = sphi 0, %s138
      %s141 = sphi 0, %s140
      %s155 = sphi 0, %s141
      %s159 = sphi 0, %s159
      %s161 = sphi 0, %s159
      %s162 = sphi 0, %s161
      %s176 = sphi 0, %s162
      %s180 = sphi 0, %s180
      %s182 = sphi 0, %s180
      %s183 = sphi 0, %s182
      %s197 = sphi 0, %s183
      %s201 = sphi 0, %s201
      %s203 = sphi 0, %s201
      %s204 = sphi 0, %s203
      %s218 = sphi 0, %s204
      %s222 = sphi 0, %s222
      %s224 = sphi 0, %s222
      %s225 = sphi 0, %s224
      %s239 = sphi 0, %s225
      %s243 = sphi 0, %s243
      %s245 = sphi 0, %s243
      %s246 = sphi 0, %s245
      %s260 = sphi 0, %s246
      %s266 = sphi 0, %s268
      %s269 = sphi 0, %s266
      %s270 = sphi 0, %s269
      %s286 = sphi 0, %s270
    $region4: #{schnet_adapter_forward_slab.1} parent=1 // loop_header_branch
      %23 = sbr.rel (%p21) target = $region8
    $region5: #{schnet_adapter_forward_slab.1} parent=1 // loop_body
      %s25 = ssub.s32 %s20, 1
      %s26 = ssub.s32 %s20, 2
      %s27 = sadd.s32 %s20, 1
      %s28 = ssub.s32 %s20, %s27
      %p29 = scmp.eq.s32.totalorder %s28, 0
      %s31 = sadd.s32 %s30, 1
      %s32 = scalar_select %p29, %s30, %s31
      %p35 = pneg %p29
      %p36 = scmp.eq.s32.totalorder %s20, 3
      %p37 = por %p35, %p36
      %p38 = scmp.ne.s32.totalorder %s30, %s33
      %p39 = scmp.eq.s32.totalorder %s20, 0
      %p40 = por %p38, %p39
      %p41 = scmp.ne.s32.totalorder %s30, %s33
      %p42 = scmp.eq.s32.totalorder %s25, 3
      %p43 = por %p41, %p42
      %p44 = scmp.ne.s32.totalorder %s33, %s34
      %p45 = scmp.eq.s32.totalorder %s25, 0
      %p46 = por %p44, %p45
      %p47 = scmp.ne.s32.totalorder %s33, %s34
      %p48 = scmp.eq.s32.totalorder %s26, 3
      %p49 = por %p47, %p48
      %p51 = scmp.ne.s32.totalorder %s34, %s50
      %p52 = scmp.eq.s32.totalorder %s26, 0
      %p53 = por %p51, %p52
      %s55 = sadd.s32 %s54, 1
      %p58 = scmp.eq.s32.totalorder %s20, 3
      %p59 = scmp.ne.s32.totalorder %s54, %s56
      %p60 = scmp.eq.s32.totalorder %s20, 0
      %p61 = por %p59, %p60
      %p62 = scmp.ne.s32.totalorder %s54, %s56
      %p63 = scmp.eq.s32.totalorder %s25, 3
      %p64 = por %p62, %p63
      %p65 = scmp.ne.s32.totalorder %s56, %s57
      %p66 = scmp.eq.s32.totalorder %s25, 0
      %p67 = por %p65, %p66
      %p68 = scmp.ne.s32.totalorder %s56, %s57
      %p69 = scmp.eq.s32.totalorder %s26, 3
      %p70 = por %p68, %p69
      %p72 = scmp.ne.s32.totalorder %s57, %s71
      %p73 = scmp.eq.s32.totalorder %s26, 0
      %p74 = por %p72, %p73
      %s76 = sadd.s32 %s75, 1
      %p79 = scmp.eq.s32.totalorder %s20, 3
      %p80 = scmp.ne.s32.totalorder %s75, %s77
      %p81 = scmp.eq.s32.totalorder %s20, 0
      %p82 = por %p80, %p81
      %p83 = scmp.ne.s32.totalorder %s75, %s77
      %p84 = scmp.eq.s32.totalorder %s25, 3
      %p85 = por %p83, %p84
      %p86 = scmp.ne.s32.totalorder %s77, %s78
      %p87 = scmp.eq.s32.totalorder %s25, 0
      %p88 = por %p86, %p87
      %p89 = scmp.ne.s32.totalorder %s77, %s78
      %p90 = scmp.eq.s32.totalorder %s26, 3
      %p91 = por %p89, %p90
      %p93 = scmp.ne.s32.totalorder %s78, %s92
      %p94 = scmp.eq.s32.totalorder %s26, 0
      %p95 = por %p93, %p94
      %s97 = sadd.s32 %s96, 1
      %p100 = scmp.eq.s32.totalorder %s20, 3
      %p101 = scmp.ne.s32.totalorder %s96, %s98
      %p102 = scmp.eq.s32.totalorder %s20, 0
      %p103 = por %p101, %p102
      %p104 = scmp.ne.s32.totalorder %s96, %s98
      %p105 = scmp.eq.s32.totalorder %s25, 3
      %p106 = por %p104, %p105
      %p107 = scmp.ne.s32.totalorder %s98, %s99
      %p108 = scmp.eq.s32.totalorder %s25, 0
      %p109 = por %p107, %p108
      %p110 = scmp.ne.s32.totalorder %s98, %s99
      %p111 = scmp.eq.s32.totalorder %s26, 3
      %p112 = por %p110, %p111
      %p114 = scmp.ne.s32.totalorder %s99, %s113
      %p115 = scmp.eq.s32.totalorder %s26, 0
      %p116 = por %p114, %p115
      %s118 = sadd.s32 %s117, 1
      %p121 = scmp.eq.s32.totalorder %s20, 3
      %p122 = scmp.ne.s32.totalorder %s117, %s119
      %p123 = scmp.eq.s32.totalorder %s20, 0
      %p124 = por %p122, %p123
      %p125 = scmp.ne.s32.totalorder %s117, %s119
      %p126 = scmp.eq.s32.totalorder %s25, 3
      %p127 = por %p125, %p126
      %p128 = scmp.ne.s32.totalorder %s119, %s120
      %p129 = scmp.eq.s32.totalorder %s25, 0
      %p130 = por %p128, %p129
      %p131 = scmp.ne.s32.totalorder %s119, %s120
      %p132 = scmp.eq.s32.totalorder %s26, 3
      %p133 = por %p131, %p132
      %p135 = scmp.ne.s32.totalorder %s120, %s134
      %p136 = scmp.eq.s32.totalorder %s26, 0
      %p137 = por %p135, %p136
      %s139 = sadd.s32 %s138, 1
      %p142 = scmp.eq.s32.totalorder %s20, 3
      %p143 = scmp.ne.s32.totalorder %s138, %s140
      %p144 = scmp.eq.s32.totalorder %s20, 0
      %p145 = por %p143, %p144
      %p146 = scmp.ne.s32.totalorder %s138, %s140
      %p147 = scmp.eq.s32.totalorder %s25, 3
      %p148 = por %p146, %p147
      %p149 = scmp.ne.s32.totalorder %s140, %s141
      %p150 = scmp.eq.s32.totalorder %s25, 0
      %p151 = por %p149, %p150
      %p152 = scmp.ne.s32.totalorder %s140, %s141
      %p153 = scmp.eq.s32.totalorder %s26, 3
      %p154 = por %p152, %p153
      %p156 = scmp.ne.s32.totalorder %s141, %s155
      %p157 = scmp.eq.s32.totalorder %s26, 0
      %p158 = por %p156, %p157
      %s160 = sadd.s32 %s159, 1
      %p163 = scmp.eq.s32.totalorder %s20, 3
      %p164 = scmp.ne.s32.totalorder %s159, %s161
      %p165 = scmp.eq.s32.totalorder %s20, 0
      %p166 = por %p164, %p165
      %p167 = scmp.ne.s32.totalorder %s159, %s161
      %p168 = scmp.eq.s32.totalorder %s25, 3
      %p169 = por %p167, %p168
      %p170 = scmp.ne.s32.totalorder %s161, %s162
      %p171 = scmp.eq.s32.totalorder %s25, 0
      %p172 = por %p170, %p171
      %p173 = scmp.ne.s32.totalorder %s161, %s162
      %p174 = scmp.eq.s32.totalorder %s26, 3
      %p175 = por %p173, %p174
      %p177 = scmp.ne.s32.totalorder %s162, %s176
      %p178 = scmp.eq.s32.totalorder %s26, 0
      %p179 = por %p177, %p178
      %s181 = sadd.s32 %s180, 1
      %p184 = scmp.eq.s32.totalorder %s20, 3
      %p185 = scmp.ne.s32.totalorder %s180, %s182
      %p186 = scmp.eq.s32.totalorder %s20, 0
      %p187 = por %p185, %p186
      %p188 = scmp.ne.s32.totalorder %s180, %s182
      %p189 = scmp.eq.s32.totalorder %s25, 3
      %p190 = por %p188, %p189
      %p191 = scmp.ne.s32.totalorder %s182, %s183
      %p192 = scmp.eq.s32.totalorder %s25, 0
      %p193 = por %p191, %p192
      %p194 = scmp.ne.s32.totalorder %s182, %s183
      %p195 = scmp.eq.s32.totalorder %s26, 3
      %p196 = por %p194, %p195
      %p198 = scmp.ne.s32.totalorder %s183, %s197
      %p199 = scmp.eq.s32.totalorder %s26, 0
      %p200 = por %p198, %p199
      %s202 = sadd.s32 %s201, 1
      %p205 = scmp.eq.s32.totalorder %s20, 3
      %p206 = scmp.ne.s32.totalorder %s201, %s203
      %p207 = scmp.eq.s32.totalorder %s20, 0
      %p208 = por %p206, %p207
      %p209 = scmp.ne.s32.totalorder %s201, %s203
      %p210 = scmp.eq.s32.totalorder %s25, 3
      %p211 = por %p209, %p210
      %p212 = scmp.ne.s32.totalorder %s203, %s204
      %p213 = scmp.eq.s32.totalorder %s25, 0
      %p214 = por %p212, %p213
      %p215 = scmp.ne.s32.totalorder %s203, %s204
      %p216 = scmp.eq.s32.totalorder %s26, 3
      %p217 = por %p215, %p216
      %p219 = scmp.ne.s32.totalorder %s204, %s218
      %p220 = scmp.eq.s32.totalorder %s26, 0
      %p221 = por %p219, %p220
      %s223 = sadd.s32 %s222, 1
      %p226 = scmp.eq.s32.totalorder %s20, 3
      %p227 = scmp.ne.s32.totalorder %s222, %s224
      %p228 = scmp.eq.s32.totalorder %s20, 0
      %p229 = por %p227, %p228
      %p230 = scmp.ne.s32.totalorder %s222, %s224
      %p231 = scmp.eq.s32.totalorder %s25, 3
      %p232 = por %p230, %p231
      %p233 = scmp.ne.s32.totalorder %s224, %s225
      %p234 = scmp.eq.s32.totalorder %s25, 0
      %p235 = por %p233, %p234
      %p236 = scmp.ne.s32.totalorder %s224, %s225
      %p237 = scmp.eq.s32.totalorder %s26, 3
      %p238 = por %p236, %p237
      %p240 = scmp.ne.s32.totalorder %s225, %s239
      %p241 = scmp.eq.s32.totalorder %s26, 0
      %p242 = por %p240, %p241
      %s244 = sadd.s32 %s243, 1
      %p247 = scmp.eq.s32.totalorder %s20, 3
      %p248 = scmp.ne.s32.totalorder %s243, %s245
      %p249 = scmp.eq.s32.totalorder %s20, 0
      %p250 = por %p248, %p249
      %p251 = scmp.ne.s32.totalorder %s243, %s245
      %p252 = scmp.eq.s32.totalorder %s25, 3
      %p253 = por %p251, %p252
      %p254 = scmp.ne.s32.totalorder %s245, %s246
      %p255 = scmp.eq.s32.totalorder %s25, 0
      %p256 = por %p254, %p255
      %p257 = scmp.ne.s32.totalorder %s245, %s246
      %p258 = scmp.eq.s32.totalorder %s26, 3
      %p259 = por %p257, %p258
      %p261 = scmp.ne.s32.totalorder %s246, %s260
      %p262 = scmp.eq.s32.totalorder %s26, 0
      %p263 = por %p261, %p262
      %s264 = ssub.s32 %s20, %s27
      %p265 = scmp.eq.s32.totalorder %s264, 0
      %s267 = sadd.s32 %s266, 1
      %s268 = scalar_select %p265, %s266, %s267
      %p271 = pneg %p265
      %p272 = scmp.eq.s32.totalorder %s20, 3
      %p273 = por %p271, %p272
      %p274 = scmp.ne.s32.totalorder %s266, %s269
      %p275 = scmp.eq.s32.totalorder %s20, 0
      %p276 = por %p274, %p275
      %p277 = scmp.ne.s32.totalorder %s266, %s269
      %p278 = scmp.eq.s32.totalorder %s25, 3
      %p279 = por %p277, %p278
      %p280 = scmp.ne.s32.totalorder %s269, %s270
      %p281 = scmp.eq.s32.totalorder %s25, 0
      %p282 = por %p280, %p281
      %p283 = scmp.ne.s32.totalorder %s269, %s270
      %p284 = scmp.eq.s32.totalorder %s26, 3
      %p285 = por %p283, %p284
      %p287 = scmp.ne.s32.totalorder %s270, %s286
      %p288 = scmp.eq.s32.totalorder %s26, 0
      %p289 = por %p287, %p288
      %p290 = scmp.le.s32.totalorder 1, %s20
      %p291 = scmp.lt.s32.totalorder %s20, 5
      %p292 = pnand %p290, %p291
      %p293 = pneg %p292
      // Predicated region
      $region9: #{schnet_adapter_forward_slab.1} parent=5 // pred_check
        _
      $region10: #{schnet_adapter_forward_slab.1} parent=5 // pred_check_branch
        %295 = sbr.rel (%p292) target = $region12
      $region11: #{schnet_adapter_forward_slab.1} parent=5 // pred_region
        %s296 = ssub.s32 %s20, 1
        // Predicated region
        $region13: #{schnet_adapter_forward_slab.1} parent=11 // pred_check
          %p297 = pneg %p67
        $region14: #{schnet_adapter_forward_slab.1} parent=11 // pred_check_branch
          %299 = sbr.rel (%p297) target = $region16
        $region15: #{schnet_adapter_forward_slab.1} parent=11 // pred_region
          _
        $region16: #{schnet_adapter_forward_slab.1} parent=11 // pred_fallthru
          _
        // Predicated region
        $region17: #{schnet_adapter_forward_slab.1} parent=11 // pred_check
          %p300 = pneg %p88
        $region18: #{schnet_adapter_forward_slab.1} parent=11 // pred_check_branch
          %302 = sbr.rel (%p300) target = $region20
        $region19: #{schnet_adapter_forward_slab.1} parent=11 // pred_region
          _
        $region20: #{schnet_adapter_forward_slab.1} parent=11 // pred_fallthru
          _
        // Predicated region
        $region21: #{schnet_adapter_forward_slab.1} parent=11 // pred_check
          %p303 = pneg %p109
        $region22: #{schnet_adapter_forward_slab.1} parent=11 // pred_check_branch
          %305 = sbr.rel (%p303) target = $region24
        $region23: #{schnet_adapter_forward_slab.1} parent=11 // pred_region
          _
        $region24: #{schnet_adapter_forward_slab.1} parent=11 // pred_fallthru
          _
        // Predicated region
        $region25: #{schnet_adapter_forward_slab.1} parent=11 // pred_check
          %p306 = pneg %p130
        $region26: #{schnet_adapter_forward_slab.1} parent=11 // pred_check_branch
          %308 = sbr.rel (%p306) target = $region28
        $region27: #{schnet_adapter_forward_slab.1} parent=11 // pred_region
          _
        $region28: #{schnet_adapter_forward_slab.1} parent=11 // pred_fallthru
          _
        // Predicated region
        $region29: #{schnet_adapter_forward_slab.1} parent=11 // pred_check
          %p309 = pneg %p151
        $region30: #{schnet_adapter_forward_slab.1} parent=11 // pred_check_branch
          %311 = sbr.rel (%p309) target = $region32
        $region31: #{schnet_adapter_forward_slab.1} parent=11 // pred_region
          _
        $region32: #{schnet_adapter_forward_slab.1} parent=11 // pred_fallthru
          _
        // Predicated region
        $region33: #{schnet_adapter_forward_slab.1} parent=11 // pred_check
          %p312 = pneg %p172
        $region34: #{schnet_adapter_forward_slab.1} parent=11 // pred_check_branch
          %314 = sbr.rel (%p312) target = $region36
        $region35: #{schnet_adapter_forward_slab.1} parent=11 // pred_region
          _
        $region36: #{schnet_adapter_forward_slab.1} parent=11 // pred_fallthru
          _
        // Predicated region
        $region37: #{schnet_adapter_forward_slab.1} parent=11 // pred_check
          %p315 = pneg %p193
        $region38: #{schnet_adapter_forward_slab.1} parent=11 // pred_check_branch
          %317 = sbr.rel (%p315) target = $region40
        $region39: #{schnet_adapter_forward_slab.1} parent=11 // pred_region
          _
        $region40: #{schnet_adapter_forward_slab.1} parent=11 // pred_fallthru
          _
        // Predicated region
        $region41: #{schnet_adapter_forward_slab.1} parent=11 // pred_check
          %p318 = pneg %p214
        $region42: #{schnet_adapter_forward_slab.1} parent=11 // pred_check_branch
          %320 = sbr.rel (%p318) target = $region44
        $region43: #{schnet_adapter_forward_slab.1} parent=11 // pred_region
          _
        $region44: #{schnet_adapter_forward_slab.1} parent=11 // pred_fallthru
          _
        // Predicated region
        $region45: #{schnet_adapter_forward_slab.1} parent=11 // pred_check
          %p321 = pneg %p235
        $region46: #{schnet_adapter_forward_slab.1} parent=11 // pred_check_branch
          %323 = sbr.rel (%p321) target = $region48
        $region47: #{schnet_adapter_forward_slab.1} parent=11 // pred_region
          _
        $region48: #{schnet_adapter_forward_slab.1} parent=11 // pred_fallthru
          _
        // Predicated region
        $region49: #{schnet_adapter_forward_slab.1} parent=11 // pred_check
          %p324 = pneg %p256
        $region50: #{schnet_adapter_forward_slab.1} parent=11 // pred_check_branch
          %326 = sbr.rel (%p324) target = $region52
        $region51: #{schnet_adapter_forward_slab.1} parent=11 // pred_region
          _
        $region52: #{schnet_adapter_forward_slab.1} parent=11 // pred_fallthru
          _
      $region12: #{schnet_adapter_forward_slab.1} parent=5 // pred_fallthru
        _
      %p327 = scmp.lt.s32.totalorder %s20, 4
      // Predicated region
      $region53: #{schnet_adapter_forward_slab.1} parent=5 // pred_check
        %p328 = pneg %p327
      $region54: #{schnet_adapter_forward_slab.1} parent=5 // pred_check_branch
        %330 = sbr.rel (%p328) target = $region56
      $region55: #{schnet_adapter_forward_slab.1} parent=5 // pred_region
        // Predicated region
        $region57: #{schnet_adapter_forward_slab.1} parent=55 // pred_check
          %p331 = pneg %p40
        $region58: #{schnet_adapter_forward_slab.1} parent=55 // pred_check_branch
          %333 = sbr.rel (%p331) target = $region60
        $region59: #{schnet_adapter_forward_slab.1} parent=55 // pred_region
          %s334 = smul.u32 2, %s20
          %p335 = scmp.lt.s32.totalorder %s334, 7
          %s336 = scalar_select %p335, %s334, 7
          %s337 = smul.addr %s336, 4
          %s338 = scalar_lea.vmem %s0, %s337
          %s339 = smul.u32 2, %s20
        $region60: #{schnet_adapter_forward_slab.1} parent=55 // pred_fallthru
          _
      $region56: #{schnet_adapter_forward_slab.1} parent=5 // pred_fallthru
        _
      %p340 = scmp.le.s32.totalorder 1, %s20
      %p341 = scmp.lt.s32.totalorder %s20, 5
      %p342 = pnand %p340, %p341
      %p343 = pneg %p342
      // Predicated region
      $region61: #{schnet_adapter_forward_slab.1} parent=5 // pred_check
        _
      $region62: #{schnet_adapter_forward_slab.1} parent=5 // pred_check_branch
        %345 = sbr.rel (%p342) target = $region64
      $region63: #{schnet_adapter_forward_slab.1} parent=5 // pred_region
        %s346 = ssub.s32 %s20, 1
        %s347 = smul.u32 2, %s25
        %p348 = scmp.lt.s32.totalorder %s347, 7
        %s349 = scalar_select %p348, %s347, 7
        %s350 = smul.addr %s349, 4
        %s351 = scalar_lea.vmem %s0, %s350
        %p352 = pneg %p46
        %p353 = pneg %p43
        %p354 = pneg %p67
        %p355 = pneg %p64
        %p356 = pneg %p88
        %p357 = pneg %p85
        %p358 = pneg %p109
        %p359 = pneg %p106
        %p360 = pneg %p130
        %p361 = pneg %p127
        %p362 = pneg %p151
        %p363 = pneg %p148
        %p364 = pneg %p172
        %p365 = pneg %p169
        %p366 = pneg %p193
        %p367 = pneg %p190
        %p368 = pneg %p214
        %p369 = pneg %p211
        %p370 = pneg %p235
        %p371 = pneg %p232
        %p372 = pneg %p256
        %p373 = pneg %p253
        %p374 = pneg %p282
        %p375 = pneg %p279
        %s376 = sand.u32 %s269, 1
        %s377 = scalar_lea.sflag [#allocation3], %s376
        %s378 = sand.u32 %s269, 1
        %s379 = smul.addr %s378, 16
        %s380 = scalar_lea.vmem [#allocation2], %s379
        %s381 = smul.u32 2, %s25
        %p382 = scmp.lt.s32.totalorder %s381, 7
        %s383 = scalar_select %p382, %s381, 7
        %s384 = smul.addr %s383, 4
        %s385 = scalar_lea.vmem %s0, %s384
        %s386 = smul.u32 2, %s25
        %s387 = smul.u32 2, %s25
        %v389 = vld [vmem:[%s385] sm:$0xf]
        %v390 = vld [vmem:[%s385 + $0x4] sm:$0xf]
        %v391 = vld [vmem:[%s1] sm:$0xf]
        %v392 = vld [vmem:[%s1 + $0x4] sm:$0xf]
        %v393 = vld [vmem:[%s1 + $0x8] sm:$0xf]
        %v394 = vld [vmem:[%s1 + $0xc] sm:$0xf]
        %v395 = vld [vmem:[%s1 + $0x10] sm:$0xf]
        %v396 = vld [vmem:[%s1 + $0x14] sm:$0xf]
        %v397 = vld [vmem:[%s1 + $0x18] sm:$0xf]
        %v398 = vld [vmem:[%s1 + $0x1c] sm:$0xf]
        %v399 = vld [vmem:[%s1 + $0x20] sm:$0xf]
        %v400 = vld [vmem:[%s1 + $0x24] sm:$0xf]
        %v401 = vld [vmem:[%s2] sm:$0x1]
        %v403 = vlaneseq
        %v404 = vshrl.u32 %v403, 7
        %v405 = vsub.s32 0, %v404
        %v406 = vrot.slane %v401, %v405
        %v410 = vunpack.c.l.b16 %v389
        %v411 = vunpack.c.l.b16 %v390
        %v412 = vpack.c.b16 %v411, %v410
        %v423 = vunpack.c.l.b16 %v391
        %v424 = vunpack.c.l.b16 %v392
        %v425 = vunpack.c.l.b16 %v393
        %v426 = vunpack.c.l.b16 %v394
        %v427 = vunpack.c.l.b16 %v395
        %v428 = vunpack.c.l.b16 %v396
        %v429 = vunpack.c.l.b16 %v397
        %v430 = vunpack.c.l.b16 %v398
        %v431 = vunpack.c.l.b16 %v399
        %v432 = vunpack.c.l.b16 %v400
        %v433 = vpack.c.b16 %v424, %v423
        %v434 = vpack.c.b16 %v426, %v425
        %v435 = vpack.c.b16 %v428, %v427
        %v436 = vpack.c.b16 %v430, %v429
        %v437 = vpack.c.b16 %v432, %v431
        %vm443 = vcmask 654336
        %v445 = vsel %vm443, %v412, 0
        %447 = vmatprep.subr.bf16.mxu0 0
        %448 = vmatpush1.bf16.msra.mxu0 0
        %449 = vmatprep.subr.bf16.mxu0 0
        %450 = vmatpush1.bf16.msra.mxu0 0
        %451 = vmatprep.subr.bf16.mxu0 0
        %452 = vmatpush1.bf16.msra.mxu0 0
        %453 = vmatprep.subr.bf16.mxu0 0
        %454 = vmatpush1.bf16.msra.mxu0 %v437
        %455 = vmatprep.subr.bf16.mxu0 0
        %456 = vmatpush1.bf16.msra.mxu0 %v436
        %457 = vmatprep.subr.bf16.mxu0 0
        %458 = vmatpush1.bf16.msra.mxu0 %v435
        %459 = vmatprep.subr.bf16.mxu0 0
        %460 = vmatpush1.bf16.msra.mxu0 %v434
        %461 = vmatprep.subr.bf16.mxu0 0
        %462 = vmatpush1.bf16.msra.mxu0 %v433
        %463 = vmatprep.subr.bf16.mxu0 0
        %464 = vmatpush2.bf16.msra.mxu0 0
        %465 = vmatprep.subr.bf16.mxu0 0
        %466 = vmatpush2.bf16.msra.mxu0 0
        %467 = vmatprep.subr.bf16.mxu0 0
        %468 = vmatpush2.bf16.msra.mxu0 0
        %469 = vmatprep.subr.bf16.mxu0 0
        %470 = vmatpush2.bf16.msra.mxu0 0
        %471 = vmatprep.subr.bf16.mxu0 0
        %472 = vmatpush2.bf16.msra.mxu0 0
        %473 = vmatprep.subr.bf16.mxu0 0
        %474 = vmatpush2.bf16.msra.mxu0 0
        %475 = vmatprep.subr.bf16.mxu0 0
        %476 = vmatpush2.bf16.msra.mxu0 0
        %477 = vmatprep.subr.bf16.mxu0 0
        %478 = vmatpush2.bf16.msra.mxu0 0
        %479 = vmatprep.mubr.bf16.mxu0 0
        %480 = vmatmul.mubr.bf16.gmra.mxu0 %v445
        %v481 = vpop.f32.mrf.mxu0
        %v482 = vadd.f32 %v406, %v481
        %v483 = vpop.f32.mrf.mxu0
        %v484 = vpop.f32.mrf.mxu0
        %v485 = vadd.f32 %v406, %v484
        %v486 = vpop.f32.mrf.mxu0
        %487 = vdwg.mxu0
        %v488 = vmax.f32 %v482, 0.0
        %v489 = vmax.f32 %v485, 0.0
        %v490 = vpack.c.bf16 %v489, %v488
        %v491 = vld [vmem:[%s3] sm:$0xf]
        %v492 = vld [vmem:[%s3 + $0x4] sm:$0xf]
        %v493 = vld [vmem:[%s3 + $0x8] sm:$0xf]
        %v494 = vld [vmem:[%s3 + $0xc] sm:$0xf]
        %v495 = vld [vmem:[%s4] sm:$0x1]
        %v497 = vlaneseq
        %v498 = vshrl.u32 %v497, 7
        %v499 = vsub.s32 0, %v498
        %v500 = vrot.slane %v495, %v499
        %v506 = vunpack.c.l.b16 %v491
        %v507 = vunpack.c.l.b16 %v492
        %v508 = vunpack.c.l.b16 %v493
        %v509 = vunpack.c.l.b16 %v494
        %v510 = vpack.c.b16 %v507, %v506
        %v511 = vpack.c.b16 %v509, %v508
        %vm514 = vcmask 261120
        %v516 = vsel %vm514, %v490, 0
        %518 = vmatprep.subr.bf16.mxu0 0
        %519 = vmatpush1.bf16.msra.mxu0 0
        %520 = vmatprep.subr.bf16.mxu0 0
        %521 = vmatpush1.bf16.msra.mxu0 0
        %522 = vmatprep.subr.bf16.mxu0 0
        %523 = vmatpush1.bf16.msra.mxu0 0
        %524 = vmatprep.subr.bf16.mxu0 0
        %525 = vmatpush1.bf16.msra.mxu0 0
        %526 = vmatprep.subr.bf16.mxu0 0
        %527 = vmatpush1.bf16.msra.mxu0 0
        %528 = vmatprep.subr.bf16.mxu0 0
        %529 = vmatpush1.bf16.msra.mxu0 0
        %530 = vmatprep.subr.bf16.mxu0 0
        %531 = vmatpush1.bf16.msra.mxu0 %v511
        %532 = vmatprep.subr.bf16.mxu0 0
        %533 = vmatpush1.bf16.msra.mxu0 %v510
        %534 = vmatprep.subr.bf16.mxu0 0
        %535 = vmatpush2.bf16.msra.mxu0 0
        %536 = vmatprep.subr.bf16.mxu0 0
        %537 = vmatpush2.bf16.msra.mxu0 0
        %538 = vmatprep.subr.bf16.mxu0 0
        %539 = vmatpush2.bf16.msra.mxu0 0
        %540 = vmatprep.subr.bf16.mxu0 0
        %541 = vmatpush2.bf16.msra.mxu0 0
        %542 = vmatprep.subr.bf16.mxu0 0
        %543 = vmatpush2.bf16.msra.mxu0 0
        %544 = vmatprep.subr.bf16.mxu0 0
        %545 = vmatpush2.bf16.msra.mxu0 0
        %546 = vmatprep.subr.bf16.mxu0 0
        %547 = vmatpush2.bf16.msra.mxu0 0
        %548 = vmatprep.subr.bf16.mxu0 0
        %549 = vmatpush2.bf16.msra.mxu0 0
        %550 = vmatprep.mubr.bf16.mxu0 0
        %551 = vmatmul.mubr.bf16.gmra.mxu0 %v516
        %v552 = vpop.f32.mrf.mxu0
        %v553 = vadd.f32 %v500, %v552
        %v554 = vpop.f32.mrf.mxu0
        %v555 = vpop.f32.mrf.mxu0
        %v556 = vadd.f32 %v500, %v555
        %v557 = vpop.f32.mrf.mxu0
        %558 = vdwg.mxu0
        %v559 = vmax.f32 %v553, 0.0
        %v560 = vmax.f32 %v556, 0.0
        %v561 = vpack.c.bf16 %v560, %v559
        %v562 = vld [vmem:[%s5] sm:$0xf]
        %v563 = vld [vmem:[%s5 + $0x4] sm:$0xf]
        %v564 = vld [vmem:[%s5 + $0x8] sm:$0xf]
        %v565 = vld [vmem:[%s5 + $0xc] sm:$0xf]
        %v566 = vld [vmem:[%s6] sm:$0x1]
        %v568 = vlaneseq
        %v569 = vshrl.u32 %v568, 7
        %v570 = vsub.s32 0, %v569
        %v571 = vrot.slane %v566, %v570
        %v577 = vunpack.c.l.b16 %v562
        %v578 = vunpack.c.l.b16 %v563
        %v579 = vunpack.c.l.b16 %v564
        %v580 = vunpack.c.l.b16 %v565
        %v581 = vpack.c.b16 %v578, %v577
        %v582 = vpack.c.b16 %v580, %v579
        %v586 = vsel %vm514, %v561, 0
        %588 = vmatprep.subr.bf16.mxu0 0
        %589 = vmatpush1.bf16.msra.mxu0 0
        %590 = vmatprep.subr.bf16.mxu0 0
        %591 = vmatpush1.bf16.msra.mxu0 0
        %592 = vmatprep.subr.bf16.mxu0 0
        %593 = vmatpush1.bf16.msra.mxu0 0
        %594 = vmatprep.subr.bf16.mxu0 0
        %595 = vmatpush1.bf16.msra.mxu0 0
        %596 = vmatprep.subr.bf16.mxu0 0
        %597 = vmatpush1.bf16.msra.mxu0 0
        %598 = vmatprep.subr.bf16.mxu0 0
        %599 = vmatpush1.bf16.msra.mxu0 0
        %600 = vmatprep.subr.bf16.mxu0 0
        %601 = vmatpush1.bf16.msra.mxu0 %v582
        %602 = vmatprep.subr.bf16.mxu0 0
        %603 = vmatpush1.bf16.msra.mxu0 %v581
        %604 = vmatprep.subr.bf16.mxu0 0
        %605 = vmatpush2.bf16.msra.mxu0 0
        %606 = vmatprep.subr.bf16.mxu0 0
        %607 = vmatpush2.bf16.msra.mxu0 0
        %608 = vmatprep.subr.bf16.mxu0 0
        %609 = vmatpush2.bf16.msra.mxu0 0
        %610 = vmatprep.subr.bf16.mxu0 0
        %611 = vmatpush2.bf16.msra.mxu0 0
        %612 = vmatprep.subr.bf16.mxu0 0
        %613 = vmatpush2.bf16.msra.mxu0 0
        %614 = vmatprep.subr.bf16.mxu0 0
        %615 = vmatpush2.bf16.msra.mxu0 0
        %616 = vmatprep.subr.bf16.mxu0 0
        %617 = vmatpush2.bf16.msra.mxu0 0
        %618 = vmatprep.subr.bf16.mxu0 0
        %619 = vmatpush2.bf16.msra.mxu0 0
        %620 = vmatprep.mubr.bf16.mxu0 0
        %621 = vmatmul.mubr.bf16.gmra.mxu0 %v586
        %v622 = vpop.f32.mrf.mxu0
        %v623 = vadd.f32 %v571, %v622
        %v624 = vpop.f32.mrf.mxu0
        %v625 = vpop.f32.mrf.mxu0
        %v626 = vadd.f32 %v571, %v625
        %v627 = vpop.f32.mrf.mxu0
        %628 = vdwg.mxu0
        %v629 = vmax.f32 %v623, 0.0
        %v630 = vmax.f32 %v626, 0.0
        %v631 = vpack.c.bf16 %v630, %v629
        %v632 = vld [vmem:[%s7] sm:$0xf]
        %v633 = vld [vmem:[%s7 + $0x4] sm:$0xf]
        %v634 = vld [vmem:[%s7 + $0x8] sm:$0xf]
        %v635 = vld [vmem:[%s7 + $0xc] sm:$0xf]
        %v636 = vld [vmem:[%s8] sm:$0x1]
        %v638 = vlaneseq
        %v639 = vshrl.u32 %v638, 7
        %v640 = vsub.s32 0, %v639
        %v641 = vrot.slane %v636, %v640
        %v647 = vunpack.c.l.b16 %v632
        %v648 = vunpack.c.l.b16 %v633
        %v649 = vunpack.c.l.b16 %v634
        %v650 = vunpack.c.l.b16 %v635
        %v651 = vpack.c.b16 %v648, %v647
        %v652 = vpack.c.b16 %v650, %v649
        %v656 = vsel %vm514, %v631, 0
        %658 = vmatprep.subr.bf16.mxu0 0
        %659 = vmatpush1.bf16.msra.mxu0 0
        %660 = vmatprep.subr.bf16.mxu0 0
        %661 = vmatpush1.bf16.msra.mxu0 0
        %662 = vmatprep.subr.bf16.mxu0 0
        %663 = vmatpush1.bf16.msra.mxu0 0
        %664 = vmatprep.subr.bf16.mxu0 0
        %665 = vmatpush1.bf16.msra.mxu0 0
        %666 = vmatprep.subr.bf16.mxu0 0
        %667 = vmatpush1.bf16.msra.mxu0 0
        %668 = vmatprep.subr.bf16.mxu0 0
        %669 = vmatpush1.bf16.msra.mxu0 0
        %670 = vmatprep.subr.bf16.mxu0 0
        %671 = vmatpush1.bf16.msra.mxu0 %v652
        %672 = vmatprep.subr.bf16.mxu0 0
        %673 = vmatpush1.bf16.msra.mxu0 %v651
        %674 = vmatprep.subr.bf16.mxu0 0
        %675 = vmatpush2.bf16.msra.mxu0 0
        %676 = vmatprep.subr.bf16.mxu0 0
        %677 = vmatpush2.bf16.msra.mxu0 0
        %678 = vmatprep.subr.bf16.mxu0 0
        %679 = vmatpush2.bf16.msra.mxu0 0
        %680 = vmatprep.subr.bf16.mxu0 0
        %681 = vmatpush2.bf16.msra.mxu0 0
        %682 = vmatprep.subr.bf16.mxu0 0
        %683 = vmatpush2.bf16.msra.mxu0 0
        %684 = vmatprep.subr.bf16.mxu0 0
        %685 = vmatpush2.bf16.msra.mxu0 0
        %686 = vmatprep.subr.bf16.mxu0 0
        %687 = vmatpush2.bf16.msra.mxu0 0
        %688 = vmatprep.subr.bf16.mxu0 0
        %689 = vmatpush2.bf16.msra.mxu0 0
        %690 = vmatprep.mubr.bf16.mxu0 0
        %691 = vmatmul.mubr.bf16.gmra.mxu0 %v656
        %v692 = vpop.f32.mrf.mxu0
        %v693 = vadd.f32 %v641, %v692
        %v694 = vpop.f32.mrf.mxu0
        %v695 = vpop.f32.mrf.mxu0
        %v696 = vadd.f32 %v641, %v695
        %v697 = vpop.f32.mrf.mxu0
        %698 = vdwg.mxu0
        %v699 = vmax.f32 %v693, 0.0
        %v700 = vmax.f32 %v696, 0.0
        %v701 = vpack.c.bf16 %v700, %v699
        %v702 = vld [vmem:[%s9] sm:$0xf]
        %v703 = vld [vmem:[%s9 + $0x4] sm:$0xf]
        %v704 = vld [vmem:[%s9 + $0x8] sm:$0xf]
        %v705 = vld [vmem:[%s9 + $0xc] sm:$0xf]
        %v706 = vld [vmem:[%s10] sm:$0x1]
        %v708 = vlaneseq
        %v709 = vshrl.u32 %v708, 7
        %v710 = vsub.s32 0, %v709
        %v711 = vrot.slane %v706, %v710
        %v717 = vunpack.c.l.b16 %v702
        %v718 = vunpack.c.l.b16 %v703
        %v719 = vunpack.c.l.b16 %v704
        %v720 = vunpack.c.l.b16 %v705
        %v721 = vpack.c.b16 %v718, %v717
        %v722 = vpack.c.b16 %v720, %v719
        %v726 = vsel %vm514, %v701, 0
        %728 = vmatprep.subr.bf16.mxu0 0
        %729 = vmatpush1.bf16.msra.mxu0 0
        %730 = vmatprep.subr.bf16.mxu0 0
        %731 = vmatpush1.bf16.msra.mxu0 0
        %732 = vmatprep.subr.bf16.mxu0 0
        %733 = vmatpush1.bf16.msra.mxu0 0
        %734 = vmatprep.subr.bf16.mxu0 0
        %735 = vmatpush1.bf16.msra.mxu0 0
        %736 = vmatprep.subr.bf16.mxu0 0
        %737 = vmatpush1.bf16.msra.mxu0 0
        %738 = vmatprep.subr.bf16.mxu0 0
        %739 = vmatpush1.bf16.msra.mxu0 0
        %740 = vmatprep.subr.bf16.mxu0 0
        %741 = vmatpush1.bf16.msra.mxu0 %v722
        %742 = vmatprep.subr.bf16.mxu0 0
        %743 = vmatpush1.bf16.msra.mxu0 %v721
        %744 = vmatprep.subr.bf16.mxu0 0
        %745 = vmatpush2.bf16.msra.mxu0 0
        %746 = vmatprep.subr.bf16.mxu0 0
        %747 = vmatpush2.bf16.msra.mxu0 0
        %748 = vmatprep.subr.bf16.mxu0 0
        %749 = vmatpush2.bf16.msra.mxu0 0
        %750 = vmatprep.subr.bf16.mxu0 0
        %751 = vmatpush2.bf16.msra.mxu0 0
        %752 = vmatprep.subr.bf16.mxu0 0
        %753 = vmatpush2.bf16.msra.mxu0 0
        %754 = vmatprep.subr.bf16.mxu0 0
        %755 = vmatpush2.bf16.msra.mxu0 0
        %756 = vmatprep.subr.bf16.mxu0 0
        %757 = vmatpush2.bf16.msra.mxu0 0
        %758 = vmatprep.subr.bf16.mxu0 0
        %759 = vmatpush2.bf16.msra.mxu0 0
        %760 = vmatprep.mubr.bf16.mxu0 0
        %761 = vmatmul.mubr.bf16.gmra.mxu0 %v726
        %v762 = vpop.f32.mrf.mxu0
        %v763 = vadd.f32 %v711, %v762
        %v764 = vpop.f32.mrf.mxu0
        %v765 = vpop.f32.mrf.mxu0
        %v766 = vadd.f32 %v711, %v765
        %v767 = vpop.f32.mrf.mxu0
        %768 = vdwg.mxu0
        %v769 = vmax.f32 %v763, 0.0
        %v770 = vmax.f32 %v766, 0.0
        %v771 = vpack.c.bf16 %v770, %v769
        %773 = vrot.lane.b32.xlu0 %v561, 32
        %v774 = vpop.permute.xlu0 %773
        %776 = vrot.lane.b32.xlu0 %v631, 64
        %v777 = vpop.permute.xlu0 %776
        %779 = vrot.lane.b32.xlu0 %v701, 96
        %v780 = vpop.permute.xlu0 %779
        %v782 = vsel %vm514, %v490, %v774
        %vm783 = vcmask 523264
        %v785 = vsel %vm783, %v782, %v777
        %vm786 = vcmask 785408
        %v788 = vsel %vm786, %v785, %v780
        %v791 = vunpack.c.l.b16 %v788
        %v792 = vunpack.c.l.b16 %v771
        %v793 = vunpack.c.h.b16 %v788
        %v794 = vunpack.c.h.b16 %v771
        %v795 = vpack.c.b16 %v792, %v791
        %v796 = vpack.c.b16 %v794, %v793
        %vm799 = vcmask 1043456
        %vm800 = vcmask 130052
        %vm801 = vmor %vm800, %vm799
        %802 = vst.msk [vmem:[%s380] sm:$0xff] %vm801, %v795
        %803 = vst.msk [vmem:[%s380 + $0x8] sm:$0xff] %vm801, %v796
        %s804 = sand.u32 %s269, 1
        %s805 = scalar_lea.sflag [#allocation3], %s804
        %s806 = sand.u32 %s269, 1
        %s807 = smul.addr %s806, 16
        %s808 = scalar_lea.vmem [#allocation2], %s807
        // Predicated region
        $region65: #{schnet_adapter_forward_slab.1} parent=63 // pred_check
          %p809 = pneg %p279
        $region66: #{schnet_adapter_forward_slab.1} parent=63 // pred_check_branch
          %811 = sbr.rel (%p809) target = $region68
        $region67: #{schnet_adapter_forward_slab.1} parent=63 // pred_region
          %s812 = smul.u32 2, %s25
          %s814 = ssub.s32 256, 256
          %815 = vsyncadd %s805, %s814
          %s816 = smul.addr %s812, 2
          %s817 = smul.addr %s816, 64
          %s818 = scalar_lea.hbm %s11, %s817
          %s819 = sshll.u32 %s808, 4
          %s820 = int_to_ptr.vmem [resolvable:$true] %s819
          %825 = dma.vmem_to_hbm [thread:$0]  %s820, 256, %s818, %s805, 128, 128, 8
        $region68: #{schnet_adapter_forward_slab.1} parent=63 // pred_fallthru
          _
      $region64: #{schnet_adapter_forward_slab.1} parent=5 // pred_fallthru
        _
      %p826 = scmp.le.s32.totalorder 2, %s20
      // Predicated region
      $region69: #{schnet_adapter_forward_slab.1} parent=5 // pred_check
        %p827 = pneg %p826
      $region70: #{schnet_adapter_forward_slab.1} parent=5 // pred_check_branch
        %829 = sbr.rel (%p827) target = $region72
      $region71: #{schnet_adapter_forward_slab.1} parent=5 // pred_region
        %s830 = ssub.s32 %s20, 2
        // Predicated region
        $region73: #{schnet_adapter_forward_slab.1} parent=71 // pred_check
          %p831 = pneg %p285
        $region74: #{schnet_adapter_forward_slab.1} parent=71 // pred_check_branch
          %833 = sbr.rel (%p831) target = $region76
        $region75: #{schnet_adapter_forward_slab.1} parent=71 // pred_region
          %s834 = sand.u32 %s270, 1
          %s835 = scalar_lea.sflag [#allocation3], %s834
          %s836 = sand.u32 %s270, 1
          %s837 = smul.addr %s836, 16
          %s838 = scalar_lea.vmem [#allocation2], %s837
          %839 = dma.done %s835, 256
        $region76: #{schnet_adapter_forward_slab.1} parent=71 // pred_fallthru
          _
      $region72: #{schnet_adapter_forward_slab.1} parent=5 // pred_fallthru
        _
    $region6: #{schnet_adapter_forward_slab.1} parent=1 // loop_footer
      %s24 = sadd.s32 1, %s20
    $region7: #{schnet_adapter_forward_slab.1} parent=1 // loop_footer_branch
      %19 = sbr.rel target = $region3
    $region8: #{schnet_adapter_forward_slab.1} parent=1 // loop_exit
      _
    %840 = vsyncpa [#allocation3], 1
    %s841 = scalar_lea.sflag [#allocation3], 1
    %842 = vsyncpa %s841, 1

</llo_original>
